<compile_context>
chip_gen: v6e
topology: v6e:2x2x1
jax: 0.10.0
libtpu: 0.0.40
codegen_flags: <defaults>
</compile_context>

<pallas_src>
import jax
import jax.numpy as jnp
from jax.experimental import pallas as pl
from jax.experimental.pallas import tpu as pltpu


def _normalize_kernel(scale_ref, bias_ref, x_ref, o_ref):
    # scale_ref, bias_ref: VMEM (Rb, 1)   -- per-row affine params
    # x_ref, o_ref:        VMEM (Rb, Cb)  -- lane-dense data block
    o_ref[...] = x_ref[...] * scale_ref[...] + bias_ref[...]


def _pick_row_block(n_rows, row_bytes, target_bytes):
    """Largest Rb such that Rb divides n_rows (no ragged blocks), Rb is a
    multiple of 8 or equals n_rows (TPU sublane tiling rule), and the block
    stays within the byte budget when possible.  Prefers >= 2 grid steps so
    v7x can shard the parallel axis across its two TensorCores."""
    candidates = [rb for rb in range(1, n_rows + 1)
                  if n_rows % rb == 0 and (rb % 8 == 0 or rb == n_rows)]
    fitting = [rb for rb in candidates if rb * row_bytes <= target_bytes]
    if fitting:
        multi = [rb for rb in fitting if n_rows // rb >= 2]
        return max(multi) if multi else max(fitting)
    # Nothing fits the budget (huge rows): take the smallest legal block; the
    # lane axis will be tiled instead.
    return min(candidates)


def _pick_col_block(hw, elem_bytes, target_bytes):
    """Largest Cb that divides hw, is a multiple of 128 (TPU lane rule) or
    equals hw, and fits the byte budget.  Falls back to the full row."""
    candidates = [cb for cb in range(1, hw + 1)
                  if hw % cb == 0 and (cb % 128 == 0 or cb == hw)]
    fitting = [cb for cb in candidates if cb * elem_bytes <= target_bytes]
    return max(fitting) if fitting else hw


def normalization_forward(img, mean, std, *, target_block_bytes=4 * 1024 * 1024):
    """img: (N, C, H, W) or (C, H, W); mean, std: (C,). Returns (img - mean) / std."""
    squeeze_batch = (img.ndim == 3)
    if squeeze_batch:
        img = img[None]
    N, C, H, W = img.shape
    n_rows = N * C
    hw = H * W
    elem_bytes = jnp.dtype(img.dtype).itemsize

    # Free reshape for contiguous NCHW: row r corresponds to (n, c) = divmod(r, C).
    x2d = img.reshape(n_rows, hw)

    # Fold normalization into a per-row affine transform: y = x * scale + bias.
    # Params computed in f32 for accuracy, cast once to the data dtype.
    mean_f = mean.astype(jnp.float32)
    std_f = std.astype(jnp.float32)
    scale = (1.0 / std_f).astype(img.dtype)
    bias = (-mean_f / std_f).astype(img.dtype)
    scale_rows = jnp.tile(scale, N).reshape(n_rows, 1)   # channel varies fastest
    bias_rows = jnp.tile(bias, N).reshape(n_rows, 1)

    row_bytes = hw * elem_bytes
    rb = _pick_row_block(n_rows, row_bytes, target_block_bytes)
    if rb * row_bytes <= target_block_bytes:
        cb = hw                                    # whole rows fit: 1-D grid over rows
    else:
        cb = _pick_col_block(hw, rb * elem_bytes, target_block_bytes)
    grid = (n_rows // rb, hw // cb)

    out2d = pl.pallas_call(
        _normalize_kernel,
        out_shape=jax.ShapeDtypeStruct((n_rows, hw), img.dtype),
        grid_spec=pl.GridSpec(
            grid=grid,
            in_specs=[
                pl.BlockSpec((rb, 1), lambda i, j: (i, 0)),    # scale (tiny)
                pl.BlockSpec((rb, 1), lambda i, j: (i, 0)),    # bias  (tiny)
                pl.BlockSpec((rb, cb), lambda i, j: (i, j)),   # img rows
            ],
            out_specs=pl.BlockSpec((rb, cb), lambda i, j: (i, j)),
        ),
        compiler_params=pltpu.CompilerParams(
            # Both axes are independent (pure elementwise map) -> megacore
            # shardable on v7x.
            dimension_semantics=("parallel", "parallel"),
            # 2 data arrays x 2 pipeline buffers x <=4 MiB blocks + tiny param
            # blocks; 32 MiB leaves headroom and is safe on v7x's 64 MiB VMEM.
            vmem_limit_bytes=32 * 1024 * 1024,
        ),
    )(scale_rows, bias_rows, x2d)

    out = out2d.reshape(N, C, H, W)
    return out[0] if squeeze_batch else out


if __name__ == "__main__":
    key = jax.random.PRNGKey(0)

    N, C, H, W = 2, 4, 16, 16
    img = jax.random.uniform(key, (N, C, H, W), dtype=jnp.float32)

    # Deterministic per-channel normalization parameters (ImageNet-like,
    # extended to C channels).
    mean = jnp.array([0.485, 0.456, 0.406, 0.5][:C], dtype=jnp.float32)
    std = jnp.array([0.229, 0.224, 0.225, 0.25][:C], dtype=jnp.float32)

    out = normalization_forward(img, mean, std)
    out = jax.block_until_ready(out)

    # Reference check (mirrors (img - mean.view(-1,1,1)) / std.view(-1,1,1)).
    ref = (img - mean[None, :, None, None]) / std[None, :, None, None]
    assert out.shape == (N, C, H, W)
    assert jnp.allclose(out, ref, atol=1e-5, rtol=1e-5)

    print("KERNEL_OK")
</pallas_src>

<mosaic_0001>
module attributes {stable_mosaic.version = 11 : i64} {
  func.func @_normalize_kernel(%arg0: i32, %arg1: i32, %arg2: memref<8x1xf32, #tpu.memory_space<vmem>>, %arg3: memref<8x1xf32, #tpu.memory_space<vmem>>, %arg4: memref<8x256xf32, #tpu.memory_space<vmem>>, %arg5: memref<8x256xf32, #tpu.memory_space<vmem>>) attributes {dimension_semantics = [#tpu.dimension_semantics<parallel>, #tpu.dimension_semantics<parallel>], iteration_bounds = array<i64: 1, 1>, scalar_prefetch = 0 : i64, scratch_operands = 0 : i64, tpu.core_type = #tpu.core_type<tc>, window_params = [{transform_indices = @transform_0, window_bounds = array<i64: 8, 1>}, {transform_indices = @transform_1, window_bounds = array<i64: 8, 1>}, {transform_indices = @transform_2, window_bounds = array<i64: 8, 256>}, {transform_indices = @transform_3, window_bounds = array<i64: 8, 256>}]} {
    %c0 = arith.constant 0 : index
    %c0_0 = arith.constant 0 : index
    %0 = vector.load %arg4[%c0, %c0_0] : memref<8x256xf32, #tpu.memory_space<vmem>>, vector<8x256xf32>
    %c0_1 = arith.constant 0 : index
    %c0_2 = arith.constant 0 : index
    %1 = vector.load %arg2[%c0_1, %c0_2] : memref<8x1xf32, #tpu.memory_space<vmem>>, vector<8x1xf32>
    %2 = vector.broadcast %1 : vector<8x1xf32> to vector<8x256xf32>
    %3 = arith.mulf %0, %2 : vector<8x256xf32>
    %c0_3 = arith.constant 0 : index
    %c0_4 = arith.constant 0 : index
    %4 = vector.load %arg3[%c0_3, %c0_4] : memref<8x1xf32, #tpu.memory_space<vmem>>, vector<8x1xf32>
    %5 = vector.broadcast %4 : vector<8x1xf32> to vector<8x256xf32>
    %6 = arith.addf %3, %5 : vector<8x256xf32>
    %c0_5 = arith.constant 0 : index
    %c0_6 = arith.constant 0 : index
    %7 = vector.load %arg5[%c0_5, %c0_6] : memref<8x256xf32, #tpu.memory_space<vmem>>, vector<8x256xf32>
    tpu.vector_store %arg5[%c0_5, %c0_6], %6 {strides = array<i32>} : memref<8x256xf32, #tpu.memory_space<vmem>>, vector<8x256xf32>,
    return
  }
  func.func @transform_0(%arg0: i32, %arg1: i32) -> (i32, i32) {
    %c0_i32 = arith.constant 0 : i32
    %c0_i32_0 = arith.constant 0 : i32
    return %arg0, %c0_i32 : i32, i32
  }
  func.func @transform_1(%arg0: i32, %arg1: i32) -> (i32, i32) {
    %c0_i32 = arith.constant 0 : i32
    %c0_i32_0 = arith.constant 0 : i32
    return %arg0, %c0_i32 : i32, i32
  }
  func.func @transform_2(%arg0: i32, %arg1: i32) -> (i32, i32) {
    %c0_i32 = arith.constant 0 : i32
    return %arg0, %arg1 : i32, i32
  }
  func.func @transform_3(%arg0: i32, %arg1: i32) -> (i32, i32) {
    %c0_i32 = arith.constant 0 : i32
    return %arg0, %arg1 : i32, i32
  }
}

</mosaic_0001>

<llo_original>
// kernel: tpu_custom_call.1
$region0: #{tpu_custom_call.1}
  #allocation0 [shape = 'u32[]', space=smem, size = 0x4, offset = 0x4, fixed_abs, tag = 'smem constant byte address 0x4 - core index']
  #allocation1 [shape = 'u32[144,128]{1,0:T(1,128)}', space=vmem, size = 0x12000, scoped, tag = 'internal scratch']
  %s0 = inlined_call_operand.vmem [shape: f32[8,1], index: 0, kind: input, shape index: {}]
  %s1 = inlined_call_operand.vmem [shape: f32[8,1], index: 1, kind: input, shape index: {}]
  %s2 = inlined_call_operand.vmem [shape: f32[8,256], index: 2, kind: input, shape index: {}]
  %s3 = inlined_call_operand.hbm [shape: f32[8,256], index: 3, kind: output, shape index: {}]
  %s4 = sld [smem:[#allocation0]]
  $region22: #{tpu_custom_call.1} parent=0
    _
  %s6 = ssub.s32 1, %s4
  %s7 = scalar_select 0, %s6, %s4
  $region1: #{tpu_custom_call.1} parent=0
    #allocation2 [shape = 'u8[8192]{0}', space=vmem, size = 0x2000, scoped, tag = 'output window, operand 0, single buffered']
    #allocation3 [shape = 's32[1]{0}', space=sflag, size = 0x4, scoped, tag = 'scoped memory for tpu_custom_call.1']
    %8 = vsyncpa [#allocation3], 0
    // Predicated region
    $region2: #{tpu_custom_call.1} parent=1 // pred_check
      _
    $region3: #{tpu_custom_call.1} parent=1 // pred_check_branch
      %10 = sbr.rel (0) target = $region5
    $region4: #{tpu_custom_call.1} parent=1 // pred_region
      _
    $region5: #{tpu_custom_call.1} parent=1 // pred_fallthru
      _
    // Predicated region
    $region6: #{tpu_custom_call.1} parent=1 // pred_check
      _
    $region7: #{tpu_custom_call.1} parent=1 // pred_check_branch
      %12 = sbr.rel (0) target = $region9
    $region8: #{tpu_custom_call.1} parent=1 // pred_region
      _
    $region9: #{tpu_custom_call.1} parent=1 // pred_fallthru
      _
    // Predicated region
    $region10: #{tpu_custom_call.1} parent=1 // pred_check
      _
    $region11: #{tpu_custom_call.1} parent=1 // pred_check_branch
      %14 = sbr.rel (0) target = $region13
    $region12: #{tpu_custom_call.1} parent=1 // pred_region
      _
    $region13: #{tpu_custom_call.1} parent=1 // pred_fallthru
      _
    %v15 = vld [vmem:[%s2] sm:$0xff]
    %v16 = vld [vmem:[%s2 + $0x8] sm:$0xff]
    %v17 = vld [vmem:[%s0] sm:$0xff]
    %19 = vset.pattern.permute.xlu0 0
    %20 = vperm.xlu0 %19, %v17
    %v21 = vpop.permute.xlu0 %20
    %v23 = vmul.f32 %v15, %v21
    %v24 = vmul.f32 %v16, %v21
    %v25 = vld [vmem:[%s1] sm:$0xff]
    %27 = vset.pattern.permute.xlu0 0
    %28 = vperm.xlu0 %27, %v25
    %v29 = vpop.permute.xlu0 %28
    %v31 = vadd.f32 %v23, %v29
    %v32 = vadd.f32 %v24, %v29
    %33 = vst [vmem:[#allocation2] sm:$0xff] %v31
    %34 = vst [vmem:[#allocation2 + $0x8] sm:$0xff] %v32
    // Predicated region
    $region14: #{tpu_custom_call.1} parent=1 // pred_check
      _
    $region15: #{tpu_custom_call.1} parent=1 // pred_check_branch
      %36 = sbr.rel (0) target = $region17
    $region16: #{tpu_custom_call.1} parent=1 // pred_region
      %s38 = ssub.s32 256, 256
      %39 = vsyncadd [#allocation3], %s38
      %s41 = sshll.u32 [#allocation2], 4
      %s42 = int_to_ptr.vmem [resolvable:$true] %s41
      %44 = dma.vmem_to_hbm [thread:$0]  %s42, 256, %s3, [#allocation3]
    $region17: #{tpu_custom_call.1} parent=1 // pred_fallthru
      _
    // Predicated region
    $region18: #{tpu_custom_call.1} parent=1 // pred_check
      _
    $region19: #{tpu_custom_call.1} parent=1 // pred_check_branch
      %46 = sbr.rel (0) target = $region21
    $region20: #{tpu_custom_call.1} parent=1 // pred_region
      %47 = dma.done [#allocation3], 256
    $region21: #{tpu_custom_call.1} parent=1 // pred_fallthru
      _
    %48 = vsyncpa [#allocation3], 1

</llo_original>
